<compile_context>
chip_gen: v7x
topology: tpu7x:2x2x1
jax: 0.10.0
libtpu: 0.0.40
codegen_flags: <defaults>
</compile_context>

<pallas_src>
import functools

import jax
import jax.numpy as jnp
from jax.experimental import pallas as pl
from jax.experimental.pallas import tpu as pltpu


_TB = 256  # batch-tile rows for the gridded (large-batch) path


def _round_up(n: int, m: int) -> int:
    return ((n + m - 1) // m) * m


def _mlp_kernel(*refs, num_layers: int):
    """Fused MLP: refs = (x, w0, b0, w1, b1, ..., w_{L-1}, b_{L-1}, out).

    x:  (B, F0)  f32
    wi: (Fi, F{i+1}) bf16   (pre-transposed)
    bi: (1, F{i+1})  f32
    out:(B, FL)  f32
    All layers are computed back-to-back; activations stay on-chip.  Matmuls
    run bf16 x bf16 on the MXU with f32 accumulation.
    """
    x_ref = refs[0]
    o_ref = refs[-1]
    layer_refs = refs[1:-1]

    x = x_ref[...].astype(jnp.bfloat16)
    for i in range(num_layers):
        w = layer_refs[2 * i][...]          # bf16 (in_f, out_f)
        b = layer_refs[2 * i + 1][...]      # f32  (1, out_f)
        y = jnp.dot(x, w, preferred_element_type=jnp.float32) + b
        if i < num_layers - 1:
            y = jnp.maximum(y, 0.0)         # ReLU on all but the last layer
            x = y.astype(jnp.bfloat16)
        else:
            x = y                           # final layer: keep f32
    o_ref[...] = x.astype(o_ref.dtype)


def init_params(key, input_size, output_size, layer_size_list):
    """Deterministic PyTorch-like (Kaiming-uniform-ish) init for each nn.Linear.

    Returns a list of (w, b) in PyTorch layout: w is (out_features, in_features), f32.
    """
    sizes = [input_size] + list(layer_size_list) + [output_size]
    params = []
    for i in range(len(sizes) - 1):
        fan_in, fan_out = sizes[i], sizes[i + 1]
        key, kw, kb = jax.random.split(key, 3)
        bound = 1.0 / jnp.sqrt(jnp.float32(fan_in))
        w = jax.random.uniform(kw, (fan_out, fan_in), jnp.float32, -bound, bound)
        b = jax.random.uniform(kb, (fan_out,), jnp.float32, -bound, bound)
        params.append((w, b))
    return params


def prepare_params(params):
    """One-time preprocessing: transpose each weight to (in_f, out_f) and cast
    to bf16 (halves weight DMA bytes, MXU-native).  Biases stay f32 (added
    after the f32 accumulation).  No padding — operands are passed at their
    true sizes."""
    prepared = []
    for w, b in params:
        wt = jnp.asarray(w.T, jnp.bfloat16)              # (in_f, out_f) bf16
        bp = jnp.asarray(b, jnp.float32).reshape(1, -1)  # (1, out_f)    f32
        prepared.append((wt, bp))
    return prepared


def _vmem_limit_bytes(prepared_params, rows, in_f, out_f):
    """Explicit VMEM budget: resident weights (x2 for pipeline buffers) +
    activation working set + headroom, clamped to fit v7x's 64 MiB physical."""
    weight_bytes = sum(
        int(w.size) * w.dtype.itemsize + int(b.size) * b.dtype.itemsize
        for w, b in prepared_params
    )
    max_f = max([in_f, out_f] + [int(w.shape[1]) for w, _ in prepared_params])
    act_bytes = 4 * rows * max_f * 4  # a few f32 intermediates per row
    needed = 2 * weight_bytes + 2 * act_bytes + (2 << 20)
    return int(min(60 << 20, max(16 << 20, needed)))


@jax.jit
def neural_network_forward(x, prepared_params):
    """MLP forward. x: (batch, input_size) f32 -> (batch, output_size) f32."""
    batch, in_f = x.shape
    num_layers = len(prepared_params)
    out_f = int(prepared_params[-1][0].shape[1])

    flat_params = []
    for w, b in prepared_params:
        flat_params += [w, b]

    kernel = functools.partial(_mlp_kernel, num_layers=num_layers)

    if batch <= _TB:
        # Grid-less single call: every operand full-extent in VMEM, no padding,
        # no wrapper-side copies of x.
        vmem_limit = _vmem_limit_bytes(prepared_params, batch, in_f, out_f)
        return pl.pallas_call(
            kernel,
            out_shape=jax.ShapeDtypeStruct((batch, out_f), jnp.float32),
            in_specs=[pl.BlockSpec(memory_space=pltpu.MemorySpace.VMEM)]
            * (1 + 2 * num_layers),
            out_specs=pl.BlockSpec(memory_space=pltpu.MemorySpace.VMEM),
            compiler_params=pltpu.CompilerParams(vmem_limit_bytes=vmem_limit),
        )(x, *flat_params)

    # Large-batch path: tile the batch axis ("parallel" -> both v7x TCs get
    # work, activations are pipelined); weights stay resident via a constant
    # index_map.
    batch_p = _round_up(batch, _TB)
    x_g = x
    if batch_p != batch:
        x_g = jnp.zeros((batch_p, in_f), x.dtype).at[:batch].set(x)

    in_specs = [pl.BlockSpec((_TB, in_f), lambda i: (i, 0))]
    for w, b in prepared_params:
        in_specs.append(pl.BlockSpec(w.shape, lambda i: (0, 0)))
        in_specs.append(pl.BlockSpec(b.shape, lambda i: (0, 0)))

    vmem_limit = _vmem_limit_bytes(prepared_params, _TB, in_f, out_f)
    y = pl.pallas_call(
        kernel,
        out_shape=jax.ShapeDtypeStruct((batch_p, out_f), jnp.float32),
        grid=(batch_p // _TB,),
        in_specs=in_specs,
        out_specs=pl.BlockSpec((_TB, out_f), lambda i: (i, 0)),
        compiler_params=pltpu.CompilerParams(
            dimension_semantics=("parallel",),
            vmem_limit_bytes=vmem_limit,
        ),
    )(x_g, *flat_params)
    return y[:batch] if batch_p != batch else y


if __name__ == "__main__":
    input_size = 32
    output_size = 16
    layer_size_list = [64, 48]
    batch = 8

    key = jax.random.PRNGKey(0)
    key, kx = jax.random.split(key)
    x = jax.random.normal(kx, (batch, input_size), jnp.float32)

    params = init_params(key, input_size, output_size, layer_size_list)
    prepared = prepare_params(params)

    out = neural_network_forward(x, prepared)
    out = jax.block_until_ready(out)

    # Pure-JAX f32 reference of the same forward pass (original PyTorch layout).
    # Tolerance relaxed because kernel weights/activations are bf16 (f32 accum).
    ref = x
    for w, b in params[:-1]:
        ref = jnp.maximum(ref @ w.T + b, 0.0)
    wl, bl = params[-1]
    ref = ref @ wl.T + bl

    assert out.shape == (batch, output_size)
    max_err = float(jnp.max(jnp.abs(out - ref)))
    assert jnp.allclose(out, ref, atol=5e-2, rtol=5e-2), f"max abs err {max_err}"

    print("KERNEL_OK")
</pallas_src>

<mosaic_0001>
module attributes {stable_mosaic.version = 11 : i64} {
  func.func @_mlp_kernel(%arg0: memref<8x32xf32, #tpu.memory_space<vmem>>, %arg1: memref<32x64xbf16, #tpu.memory_space<vmem>>, %arg2: memref<1x64xf32, #tpu.memory_space<vmem>>, %arg3: memref<64x48xbf16, #tpu.memory_space<vmem>>, %arg4: memref<1x48xf32, #tpu.memory_space<vmem>>, %arg5: memref<48x16xbf16, #tpu.memory_space<vmem>>, %arg6: memref<1x16xf32, #tpu.memory_space<vmem>>, %arg7: memref<8x16xf32, #tpu.memory_space<vmem>>) attributes {dimension_semantics = [], scalar_prefetch = 0 : i64, scratch_operands = 0 : i64, tpu.core_type = #tpu.core_type<tc>} {
    %c0 = arith.constant 0 : index
    %c0_0 = arith.constant 0 : index
    %0 = vector.load %arg0[%c0, %c0_0] : memref<8x32xf32, #tpu.memory_space<vmem>>, vector<8x32xf32>
    %1 = arith.truncf %0 : vector<8x32xf32> to vector<8x32xbf16>
    %c0_1 = arith.constant 0 : index
    %c0_2 = arith.constant 0 : index
    %2 = vector.load %arg1[%c0_1, %c0_2] : memref<32x64xbf16, #tpu.memory_space<vmem>>, vector<32x64xbf16>
    %c0_3 = arith.constant 0 : index
    %c0_4 = arith.constant 0 : index
    %3 = vector.load %arg2[%c0_3, %c0_4] : memref<1x64xf32, #tpu.memory_space<vmem>>, vector<1x64xf32>
    %cst = arith.constant dense<0.000000e+00> : vector<8x64xf32>
    %4 = tpu.matmul %1, %2, %cst {dimension_numbers = #tpu.dot_dimension_numbers<[1], [0], [0], [1], [0, 0, 1, 1], [], []>} : vector<8x32xbf16>, vector<32x64xbf16>, vector<8x64xf32> -> vector<8x64xf32>
    %5 = vector.broadcast %3 : vector<1x64xf32> to vector<8x64xf32>
    %6 = arith.addf %4, %5 : vector<8x64xf32>
    %cst_5 = arith.constant 0.000000e+00 : f32
    %7 = vector.broadcast %cst_5 : f32 to vector<8x64xf32>
    %8 = arith.maximumf %6, %7 : vector<8x64xf32>
    %9 = arith.truncf %8 : vector<8x64xf32> to vector<8x64xbf16>
    %c0_6 = arith.constant 0 : index
    %c0_7 = arith.constant 0 : index
    %10 = vector.load %arg3[%c0_6, %c0_7] : memref<64x48xbf16, #tpu.memory_space<vmem>>, vector<64x48xbf16>
    %c0_8 = arith.constant 0 : index
    %c0_9 = arith.constant 0 : index
    %11 = vector.load %arg4[%c0_8, %c0_9] : memref<1x48xf32, #tpu.memory_space<vmem>>, vector<1x48xf32>
    %cst_10 = arith.constant dense<0.000000e+00> : vector<8x48xf32>
    %12 = tpu.matmul %9, %10, %cst_10 {dimension_numbers = #tpu.dot_dimension_numbers<[1], [0], [0], [1], [0, 0, 1, 1], [], []>} : vector<8x64xbf16>, vector<64x48xbf16>, vector<8x48xf32> -> vector<8x48xf32>
    %13 = vector.broadcast %11 : vector<1x48xf32> to vector<8x48xf32>
    %14 = arith.addf %12, %13 : vector<8x48xf32>
    %cst_11 = arith.constant 0.000000e+00 : f32
    %15 = vector.broadcast %cst_11 : f32 to vector<8x48xf32>
    %16 = arith.maximumf %14, %15 : vector<8x48xf32>
    %17 = arith.truncf %16 : vector<8x48xf32> to vector<8x48xbf16>
    %c0_12 = arith.constant 0 : index
    %c0_13 = arith.constant 0 : index
    %18 = vector.load %arg5[%c0_12, %c0_13] : memref<48x16xbf16, #tpu.memory_space<vmem>>, vector<48x16xbf16>
    %c0_14 = arith.constant 0 : index
    %c0_15 = arith.constant 0 : index
    %19 = vector.load %arg6[%c0_14, %c0_15] : memref<1x16xf32, #tpu.memory_space<vmem>>, vector<1x16xf32>
    %cst_16 = arith.constant dense<0.000000e+00> : vector<8x16xf32>
    %20 = tpu.matmul %17, %18, %cst_16 {dimension_numbers = #tpu.dot_dimension_numbers<[1], [0], [0], [1], [0, 0, 1, 1], [], []>} : vector<8x48xbf16>, vector<48x16xbf16>, vector<8x16xf32> -> vector<8x16xf32>
    %21 = vector.broadcast %19 : vector<1x16xf32> to vector<8x16xf32>
    %22 = arith.addf %20, %21 : vector<8x16xf32>
    %c0_17 = arith.constant 0 : index
    %c0_18 = arith.constant 0 : index
    %23 = vector.load %arg7[%c0_17, %c0_18] : memref<8x16xf32, #tpu.memory_space<vmem>>, vector<8x16xf32>
    tpu.vector_store %arg7[%c0_17, %c0_18], %22 {strides = array<i32>} : memref<8x16xf32, #tpu.memory_space<vmem>>, vector<8x16xf32>,
    return
  }
}

</mosaic_0001>

<llo_original>
// kernel: neural_network_forward.1
$region0: #{neural_network_forward.1}
  #allocation0 [shape = 'u32[]', space=smem, size = 0x4, offset = 0x4, fixed_abs, tag = 'smem constant byte address 0x4 - core index']
  #allocation1 [shape = 'u32[144,128]{1,0:T(1,128)}', space=vmem, size = 0x12000, scoped, tag = 'internal scratch']
  %s0 = inlined_call_operand.vmem [shape: f32[8,32], index: 0, kind: input, shape index: {}]
  %s1 = inlined_call_operand.vmem [shape: bf16[32,64], index: 1, kind: input, shape index: {}]
  %s2 = inlined_call_operand.vmem [shape: f32[1,64], index: 2, kind: input, shape index: {}]
  %s3 = inlined_call_operand.vmem [shape: bf16[64,48], index: 3, kind: input, shape index: {}]
  %s4 = inlined_call_operand.vmem [shape: f32[1,48], index: 4, kind: input, shape index: {}]
  %s5 = inlined_call_operand.vmem [shape: bf16[48,16], index: 5, kind: input, shape index: {}]
  %s6 = inlined_call_operand.vmem [shape: f32[1,16], index: 6, kind: input, shape index: {}]
  %s7 = inlined_call_operand.hbm [shape: f32[8,16], index: 7, kind: output, shape index: {}]
  %s8 = sld [smem:[#allocation0]]
  $region38: #{neural_network_forward.1} parent=0
    _
  %s10 = ssub.s32 1, %s8
  %s11 = scalar_select 0, %s10, %s8
  $region1: #{neural_network_forward.1} parent=0
    #allocation2 [shape = 'u8[4096]{0}', space=vmem, size = 0x1000, scoped, tag = 'output window, operand 0, single buffered']
    #allocation3 [shape = 's32[1]{0}', space=sflag, size = 0x4, scoped, tag = 'scoped memory for neural_network_forward.1']
    %12 = vsyncpa [#allocation3], 0
    // Predicated region
    $region2: #{neural_network_forward.1} parent=1 // pred_check
      _
    $region3: #{neural_network_forward.1} parent=1 // pred_check_branch
      %14 = sbr.rel (0) target = $region5
    $region4: #{neural_network_forward.1} parent=1 // pred_region
      _
    $region5: #{neural_network_forward.1} parent=1 // pred_fallthru
      _
    // Predicated region
    $region6: #{neural_network_forward.1} parent=1 // pred_check
      _
    $region7: #{neural_network_forward.1} parent=1 // pred_check_branch
      %16 = sbr.rel (0) target = $region9
    $region8: #{neural_network_forward.1} parent=1 // pred_region
      _
    $region9: #{neural_network_forward.1} parent=1 // pred_fallthru
      _
    // Predicated region
    $region10: #{neural_network_forward.1} parent=1 // pred_check
      _
    $region11: #{neural_network_forward.1} parent=1 // pred_check_branch
      %18 = sbr.rel (0) target = $region13
    $region12: #{neural_network_forward.1} parent=1 // pred_region
      _
    $region13: #{neural_network_forward.1} parent=1 // pred_fallthru
      _
    // Predicated region
    $region14: #{neural_network_forward.1} parent=1 // pred_check
      _
    $region15: #{neural_network_forward.1} parent=1 // pred_check_branch
      %20 = sbr.rel (0) target = $region17
    $region16: #{neural_network_forward.1} parent=1 // pred_region
      _
    $region17: #{neural_network_forward.1} parent=1 // pred_fallthru
      _
    // Predicated region
    $region18: #{neural_network_forward.1} parent=1 // pred_check
      _
    $region19: #{neural_network_forward.1} parent=1 // pred_check_branch
      %22 = sbr.rel (0) target = $region21
    $region20: #{neural_network_forward.1} parent=1 // pred_region
      _
    $region21: #{neural_network_forward.1} parent=1 // pred_fallthru
      _
    // Predicated region
    $region22: #{neural_network_forward.1} parent=1 // pred_check
      _
    $region23: #{neural_network_forward.1} parent=1 // pred_check_branch
      %24 = sbr.rel (0) target = $region25
    $region24: #{neural_network_forward.1} parent=1 // pred_region
      _
    $region25: #{neural_network_forward.1} parent=1 // pred_fallthru
      _
    // Predicated region
    $region26: #{neural_network_forward.1} parent=1 // pred_check
      _
    $region27: #{neural_network_forward.1} parent=1 // pred_check_branch
      %26 = sbr.rel (0) target = $region29
    $region28: #{neural_network_forward.1} parent=1 // pred_region
      _
    $region29: #{neural_network_forward.1} parent=1 // pred_fallthru
      _
    %v28 = vld [vmem:[%s0] sm:$0xff]
    %v29 = vpack.c.bf16 %v28, %v28
    %v30 = vld [vmem:[%s1] sm:$0xf]
    %v31 = vld [vmem:[%s1 + $0x4] sm:$0xf]
    %v32 = vld [vmem:[%s1 + $0x8] sm:$0xf]
    %v33 = vld [vmem:[%s1 + $0xc] sm:$0xf]
    %v34 = vld [vmem:[%s2] sm:$0x1]
    %v36 = vlaneseq
    %v37 = vshrl.u32 %v36, 7
    %v38 = vsub.s32 0, %v37
    %v39 = vrot.slane %v34, %v38
    %v45 = vunpack.c.l.b16 %v30
    %v46 = vunpack.c.l.b16 %v31
    %v47 = vunpack.c.l.b16 %v32
    %v48 = vunpack.c.l.b16 %v33
    %v49 = vpack.c.b16 %v46, %v45
    %v50 = vpack.c.b16 %v48, %v47
    %vm53 = vcmask 261120
    %v55 = vsel %vm53, %v29, 0
    %57 = vmatprep.subr.bf16.mxu0 0
    %58 = vmatpush1.bf16.msra.mxu0 %v49
    %59 = vmatprep.subr.bf16.mxu0 0
    %60 = vmatpush1.bf16.msra.mxu0 %v50
    %61 = vmatprep.subr.bf16.mxu0 0
    %62 = vmatpush1.bf16.msra.mxu0 0
    %63 = vmatprep.subr.bf16.mxu0 0
    %64 = vmatpush1.bf16.msra.mxu0 0
    %65 = vmatprep.subr.bf16.mxu0 0
    %66 = vmatpush1.bf16.msra.mxu0 0
    %67 = vmatprep.subr.bf16.mxu0 0
    %68 = vmatpush1.bf16.msra.mxu0 0
    %69 = vmatprep.subr.bf16.mxu0 0
    %70 = vmatpush1.bf16.msra.mxu0 0
    %71 = vmatprep.subr.bf16.mxu0 0
    %72 = vmatpush1.bf16.msra.mxu0 0
    %73 = vmatprep.subr.bf16.mxu0 0
    %74 = vmatpush1.bf16.msra.mxu0 0
    %75 = vmatprep.subr.bf16.mxu0 0
    %76 = vmatpush1.bf16.msra.mxu0 0
    %77 = vmatprep.subr.bf16.mxu0 0
    %78 = vmatpush1.bf16.msra.mxu0 0
    %79 = vmatprep.subr.bf16.mxu0 0
    %80 = vmatpush1.bf16.msra.mxu0 0
    %81 = vmatprep.subr.bf16.mxu0 0
    %82 = vmatpush1.bf16.msra.mxu0 0
    %83 = vmatprep.subr.bf16.mxu0 0
    %84 = vmatpush1.bf16.msra.mxu0 0
    %85 = vmatprep.subr.bf16.mxu0 0
    %86 = vmatpush1.bf16.msra.mxu0 0
    %87 = vmatprep.subr.bf16.mxu0 0
    %88 = vmatpush1.bf16.msra.mxu0 0
    %89 = vmatprep.mubr.bf16.mxu0 0
    %90 = vmatmul.mubr.bf16.gmra.mrb[0].mxu0 %v55
    %v91 = vpop.f32.mrb[0].mxu0
    %v92 = vadd.f32 %v39, %v91
    %v93 = vpop.f32.mrb[0].mxu0
    %v94 = vpop.f32.mrb[0].mxu0
    %v95 = vpop.f32.mrb[0].mxu0
    %96 = vdwg.mxu0
    %v97 = vmax.f32 %v92, 0.0
    %v98 = vpack.c.bf16 %v97, %v97
    %v99 = vld [vmem:[%s3] sm:$0xf]
    %v100 = vld [vmem:[%s3 + $0x4] sm:$0xf]
    %v101 = vld [vmem:[%s3 + $0x8] sm:$0xf]
    %v102 = vld [vmem:[%s3 + $0xc] sm:$0xf]
    %v103 = vld [vmem:[%s3 + $0x10] sm:$0xf]
    %v104 = vld [vmem:[%s3 + $0x14] sm:$0xf]
    %v105 = vld [vmem:[%s3 + $0x18] sm:$0xf]
    %v106 = vld [vmem:[%s3 + $0x1c] sm:$0xf]
    %v107 = vld [vmem:[%s4] sm:$0x1]
    %v109 = vlaneseq
    %v110 = vshrl.u32 %v109, 7
    %v111 = vsub.s32 0, %v110
    %v112 = vrot.slane %v107, %v111
    %v122 = vunpack.c.l.b16 %v99
    %v123 = vunpack.c.l.b16 %v100
    %v124 = vunpack.c.l.b16 %v101
    %v125 = vunpack.c.l.b16 %v102
    %v126 = vunpack.c.l.b16 %v103
    %v127 = vunpack.c.l.b16 %v104
    %v128 = vunpack.c.l.b16 %v105
    %v129 = vunpack.c.l.b16 %v106
    %v130 = vpack.c.b16 %v123, %v122
    %v131 = vpack.c.b16 %v125, %v124
    %v132 = vpack.c.b16 %v127, %v126
    %v133 = vpack.c.b16 %v129, %v128
    %vm138 = vcmask 523264
    %v140 = vsel %vm138, %v98, 0
    %142 = vmatprep.subr.bf16.mxu0 0
    %143 = vmatpush1.bf16.msra.mxu0 %v130
    %144 = vmatprep.subr.bf16.mxu0 0
    %145 = vmatpush1.bf16.msra.mxu0 %v131
    %146 = vmatprep.subr.bf16.mxu0 0
    %147 = vmatpush1.bf16.msra.mxu0 %v132
    %148 = vmatprep.subr.bf16.mxu0 0
    %149 = vmatpush1.bf16.msra.mxu0 %v133
    %150 = vmatprep.subr.bf16.mxu0 0
    %151 = vmatpush1.bf16.msra.mxu0 0
    %152 = vmatprep.subr.bf16.mxu0 0
    %153 = vmatpush1.bf16.msra.mxu0 0
    %154 = vmatprep.subr.bf16.mxu0 0
    %155 = vmatpush1.bf16.msra.mxu0 0
    %156 = vmatprep.subr.bf16.mxu0 0
    %157 = vmatpush1.bf16.msra.mxu0 0
    %158 = vmatprep.subr.bf16.mxu0 0
    %159 = vmatpush1.bf16.msra.mxu0 0
    %160 = vmatprep.subr.bf16.mxu0 0
    %161 = vmatpush1.bf16.msra.mxu0 0
    %162 = vmatprep.subr.bf16.mxu0 0
    %163 = vmatpush1.bf16.msra.mxu0 0
    %164 = vmatprep.subr.bf16.mxu0 0
    %165 = vmatpush1.bf16.msra.mxu0 0
    %166 = vmatprep.subr.bf16.mxu0 0
    %167 = vmatpush1.bf16.msra.mxu0 0
    %168 = vmatprep.subr.bf16.mxu0 0
    %169 = vmatpush1.bf16.msra.mxu0 0
    %170 = vmatprep.subr.bf16.mxu0 0
    %171 = vmatpush1.bf16.msra.mxu0 0
    %172 = vmatprep.subr.bf16.mxu0 0
    %173 = vmatpush1.bf16.msra.mxu0 0
    %174 = vmatprep.mubr.bf16.mxu0 0
    %175 = vmatmul.mubr.bf16.gmra.mrb[0].mxu0 %v140
    %v176 = vpop.f32.mrb[0].mxu0
    %v177 = vadd.f32 %v112, %v176
    %v178 = vpop.f32.mrb[0].mxu0
    %v179 = vpop.f32.mrb[0].mxu0
    %v180 = vpop.f32.mrb[0].mxu0
    %181 = vdwg.mxu0
    %v182 = vmax.f32 %v177, 0.0
    %v183 = vpack.c.bf16 %v182, %v182
    %v184 = vld [vmem:[%s5] sm:$0xf]
    %v185 = vld [vmem:[%s5 + $0x4] sm:$0xf]
    %v186 = vld [vmem:[%s5 + $0x8] sm:$0xf]
    %v187 = vld [vmem:[%s5 + $0xc] sm:$0xf]
    %v188 = vld [vmem:[%s5 + $0x10] sm:$0xf]
    %v189 = vld [vmem:[%s5 + $0x14] sm:$0xf]
    %v190 = vld [vmem:[%s6] sm:$0x1]
    %v192 = vlaneseq
    %v193 = vshrl.u32 %v192, 7
    %v194 = vsub.s32 0, %v193
    %v195 = vrot.slane %v190, %v194
    %v203 = vunpack.c.l.b16 %v184
    %v204 = vunpack.c.l.b16 %v185
    %v205 = vunpack.c.l.b16 %v186
    %v206 = vunpack.c.l.b16 %v187
    %v207 = vunpack.c.l.b16 %v188
    %v208 = vunpack.c.l.b16 %v189
    %v209 = vpack.c.b16 %v204, %v203
    %v210 = vpack.c.b16 %v206, %v205
    %v211 = vpack.c.b16 %v208, %v207
    %vm215 = vcmask 392192
    %v217 = vsel %vm215, %v183, 0
    %219 = vmatprep.subr.bf16.mxu0 0
    %220 = vmatpush1.bf16.msra.mxu0 %v209
    %221 = vmatprep.subr.bf16.mxu0 0
    %222 = vmatpush1.bf16.msra.mxu0 %v210
    %223 = vmatprep.subr.bf16.mxu0 0
    %224 = vmatpush1.bf16.msra.mxu0 %v211
    %225 = vmatprep.subr.bf16.mxu0 0
    %226 = vmatpush1.bf16.msra.mxu0 0
    %227 = vmatprep.subr.bf16.mxu0 0
    %228 = vmatpush1.bf16.msra.mxu0 0
    %229 = vmatprep.subr.bf16.mxu0 0
    %230 = vmatpush1.bf16.msra.mxu0 0
    %231 = vmatprep.subr.bf16.mxu0 0
    %232 = vmatpush1.bf16.msra.mxu0 0
    %233 = vmatprep.subr.bf16.mxu0 0
    %234 = vmatpush1.bf16.msra.mxu0 0
    %235 = vmatprep.subr.bf16.mxu0 0
    %236 = vmatpush1.bf16.msra.mxu0 0
    %237 = vmatprep.subr.bf16.mxu0 0
    %238 = vmatpush1.bf16.msra.mxu0 0
    %239 = vmatprep.subr.bf16.mxu0 0
    %240 = vmatpush1.bf16.msra.mxu0 0
    %241 = vmatprep.subr.bf16.mxu0 0
    %242 = vmatpush1.bf16.msra.mxu0 0
    %243 = vmatprep.subr.bf16.mxu0 0
    %244 = vmatpush1.bf16.msra.mxu0 0
    %245 = vmatprep.subr.bf16.mxu0 0
    %246 = vmatpush1.bf16.msra.mxu0 0
    %247 = vmatprep.subr.bf16.mxu0 0
    %248 = vmatpush1.bf16.msra.mxu0 0
    %249 = vmatprep.subr.bf16.mxu0 0
    %250 = vmatpush1.bf16.msra.mxu0 0
    %251 = vmatprep.mubr.bf16.mxu0 0
    %252 = vmatmul.mubr.bf16.gmra.mrb[0].mxu0 %v217
    %v253 = vpop.f32.mrb[0].mxu0
    %v254 = vadd.f32 %v195, %v253
    %v255 = vpop.f32.mrb[0].mxu0
    %v256 = vpop.f32.mrb[0].mxu0
    %v257 = vpop.f32.mrb[0].mxu0
    %258 = vdwg.mxu0
    %vm259 = vcmask 130048
    %260 = vst.msk [vmem:[#allocation2] sm:$0xff] %vm259, %v254
    // Predicated region
    $region30: #{neural_network_forward.1} parent=1 // pred_check
      _
    $region31: #{neural_network_forward.1} parent=1 // pred_check_branch
      %262 = sbr.rel (0) target = $region33
    $region32: #{neural_network_forward.1} parent=1 // pred_region
      %s264 = ssub.s32 128, 128
      %265 = vsyncadd [#allocation3], %s264
      %s267 = sshll.u32 [#allocation2], 4
      %s268 = int_to_ptr.vmem [resolvable:$true] %s267
      %270 = dma.vmem_to_hbm [thread:$0]  %s268, 128, %s7, [#allocation3]
    $region33: #{neural_network_forward.1} parent=1 // pred_fallthru
      _
    // Predicated region
    $region34: #{neural_network_forward.1} parent=1 // pred_check
      _
    $region35: #{neural_network_forward.1} parent=1 // pred_check_branch
      %272 = sbr.rel (0) target = $region37
    $region36: #{neural_network_forward.1} parent=1 // pred_region
      %273 = dma.done [#allocation3], 128
    $region37: #{neural_network_forward.1} parent=1 // pred_fallthru
      _
    %274 = vsyncpa [#allocation3], 1

</llo_original>
